<compile_context>
chip_gen: v6e
topology: v6e:2x2x1
jax: 0.10.0
libtpu: 0.0.40
codegen_flags: <defaults>
</compile_context>

<pallas_src>
import functools

import numpy as np
import jax
import jax.numpy as jnp
from jax import lax
from jax.experimental import pallas as pl
from jax.experimental.pallas import tpu as pltpu


def precompute_pos_neg_mask(batch_size, world_size=1, num_pos=2, rank=0):
    """Numpy re-implementation of the module's precompute_pos_neg_mask (reference only)."""
    num_neg = num_pos
    effective_batch_size = batch_size * world_size * num_pos
    total_images = effective_batch_size * num_neg
    bs = effective_batch_size // world_size          # local batch size
    orig_images = bs // num_pos
    pos_mask = np.zeros((bs * num_neg, total_images), dtype=np.float32)
    neg_mask = np.zeros((bs * num_neg, total_images), dtype=np.float32)

    all_indices = np.arange(total_images)
    pairs = orig_images * np.arange(num_pos)
    all_pos_members = []
    for _rank in range(world_size):
        all_pos_members += list(_rank * (bs * 2) + np.arange(bs))
    all_indices_pos_removed = np.delete(all_indices, all_pos_members)
    orig_members = np.arange(orig_images)

    for anchor in np.arange(num_pos):
        for img_idx in range(orig_images):
            delete_inds = bs * rank + img_idx + pairs
            neg_inds = np.delete(all_indices_pos_removed, delete_inds)
            neg_mask[anchor * orig_images + img_idx, neg_inds] = 1.0
        for pos in np.delete(np.arange(num_pos), anchor):
            pos_inds = bs * num_neg * rank + pos * orig_images + orig_members
            rows = np.arange(anchor * orig_images, (anchor + 1) * orig_images)
            pos_mask[rows, pos_inds] = 1.0
    return pos_mask, neg_mask


def _infonce_kernel(emb_ref, loss_ref, xn_ref, acc_ref, *, inv_temp, b, tq, in_dtype):
    i = pl.program_id(0)
    n_total, d = xn_ref.shape
    half = 2 * b                      # number of anchor rows == n_total // 2
    straddle = tq > b                 # single tile covering all anchor rows [0, 2b)

    @pl.when(i == 0)
    def _init():
        acc_ref[...] = jnp.zeros_like(acc_ref)

        def _normalize(stage):
            # One DMA of the raw embedding HBM -> VMEM staging (f32), then
            # L2-normalize and store the keys once (bf16, MXU-native).
            pltpu.sync_copy(emb_ref, stage)
            x = stage[...].astype(jnp.float32)
            sumsq = jnp.sum(x * x, axis=1, keepdims=True)
            xn_ref[...] = (x * lax.rsqrt(jnp.maximum(sumsq, jnp.float32(1e-24)))
                           ).astype(xn_ref.dtype)

        pl.run_scoped(_normalize, pltpu.VMEM((n_total, d), in_dtype))

    row0 = pl.multiple_of(i * tq, tq)
    xq = xn_ref[pl.ds(row0, tq), :]                 # (tq, D)  anchor rows (< 2b)
    neg_keys = xn_ref[pl.ds(half, half), :]         # (2b, D)  negative block rows

    # Negative similarities only: (tq, D) x (2b, D) contracting on D, bf16 x bf16
    # on the MXU with f32 accumulation.  Columns [0, 2b) never hold negatives.
    neg_logits = lax.dot_general(
        xq, neg_keys, (((1,), (1,)), ((), ())),
        preferred_element_type=jnp.float32) * jnp.float32(inv_temp)
    # Unit-norm rows -> logits <= inv_temp; subtracting the constant cancels
    # exactly in pos/(pos+neg) (it equals the old row max = self-similarity).
    sim = jnp.exp(neg_logits - jnp.float32(inv_temp))          # (tq, 2b) f32

    # Single positive per anchor row r: column (r + b) mod 2b.  Computed as an
    # elementwise product + row-sum against the partner rows (no left-half matmul).
    xqf = xq.astype(jnp.float32)
    if straddle:
        # tq == 2b: partner block is the anchor block rolled by b rows.
        partner = jnp.concatenate([xqf[b:], xqf[:b]], axis=0)
    else:
        # b % tq == 0: the partner rows of this tile form a contiguous slice.
        prow0 = jnp.where(row0 < b, row0 + b, row0 - b)
        prow0 = pl.multiple_of(prow0, tq)
        partner = xn_ref[pl.ds(prow0, tq), :].astype(jnp.float32)
    pos_logit = jnp.sum(xqf * partner, axis=1, keepdims=True) * jnp.float32(inv_temp)
    pos = jnp.exp(pos_logit - jnp.float32(inv_temp))           # (tq, 1)

    # Negative mask local to the right-half block: exclude the two columns that
    # are the other views of the same original image (c == r mod b, c == r mod b + b).
    # Only a (tq,1) row iota and a (1,2b) column iota; no wide modulo.
    r = row0 + lax.broadcasted_iota(jnp.int32, (tq, 1), 0)
    r_mod = jnp.where(r >= b, r - b, r)                        # (tq, 1)
    c = lax.broadcasted_iota(jnp.int32, (1, half), 1)          # (1, 2b)
    neg_m = (c != r_mod) & (c != r_mod + b)                    # (tq, 2b)
    neg = jnp.sum(jnp.where(neg_m, sim, 0.0), axis=1, keepdims=True)

    log_ratio = jnp.log(pos) - jnp.log(pos + neg)              # (tq, 1)
    acc_ref[...] += jnp.sum(log_ratio, keepdims=True)          # (1, 1)

    @pl.when(i == pl.num_programs(0) - 1)
    def _finalize():
        loss_ref[...] = -acc_ref[...] * jnp.float32(1.0 / half)


def negative_mining_infonce_loss(embedding, temperature=0.1, keys_dtype=jnp.bfloat16):
    """embedding: (N, D) with N = 4 * batch_size (cat of [pos0, pos1, neg0, neg1]).

    world_size=1 / gather_distributed=False forward of NegativeMiningInfoNCECriterion.
    Returns the scalar loss. Set keys_dtype=jnp.float32 for bit-faithful f32 keys.
    """
    n, d = embedding.shape
    assert n % 4 == 0, "N must be 4 * batch_size ([pos0, pos1, neg0, neg1])"
    b = n // 4          # original images per view
    half = 2 * b        # anchor rows entering the loss

    # Anchor-row tile: largest power-of-two (<=128, MXU-friendly, v7x-safe) that
    # divides b so that tiles never straddle the view boundary at b; otherwise a
    # single tile covering all anchor rows (handled via a static roll-by-b).
    tq = None
    for cand in (128, 64, 32, 16, 8):
        if b % cand == 0:
            tq = cand
            break
    if tq is None:
        tq = half
    num_tiles = half // tq

    # Explicit VMEM budget: resident keys + init staging peak + per-tile working set.
    itemsize_keys = jnp.dtype(keys_dtype).itemsize
    itemsize_in = jnp.dtype(embedding.dtype).itemsize
    est = (n * d * (itemsize_keys + itemsize_in)
           + 8 * tq * max(half, 128) * 4
           + 6 * tq * d * 4
           + (2 << 20))
    try:
        phys_vmem = int(pltpu.get_tpu_info().vmem_capacity_bytes)
    except Exception:
        phys_vmem = 64 << 20          # v7x-safe fallback
    vmem_limit = int(min(max(est, 32 << 20), int(phys_vmem * 0.85)))

    kernel = functools.partial(
        _infonce_kernel, inv_temp=1.0 / float(temperature), b=b, tq=tq,
        in_dtype=embedding.dtype)

    out = pl.pallas_call(
        kernel,
        out_shape=jax.ShapeDtypeStruct((1, 1), jnp.float32),
        grid=(num_tiles,),
        in_specs=[
            # Raw HBM ref: single explicit copy at i==0, no pipelined VMEM block.
            pl.BlockSpec(memory_space=pl.ANY),
        ],
        out_specs=pl.BlockSpec((1, 1), lambda i: (0, 0)),
        scratch_shapes=[
            pltpu.VMEM((n, d), keys_dtype),    # normalized keys (bf16), computed once
            pltpu.VMEM((1, 1), jnp.float32),   # running sum of log-ratios
        ],
        compiler_params=pltpu.CompilerParams(
            dimension_semantics=("arbitrary",),   # resident keys + accumulator carry
            vmem_limit_bytes=vmem_limit),
    )(embedding)
    return out[0, 0]


def _reference_loss(embedding, pos_mask, neg_mask, temperature=0.1,
                    keys_dtype=jnp.bfloat16):
    """Pure-JAX reference mirroring the PyTorch forward (explicit masks), with the
    same key precision as the kernel."""
    x = embedding.astype(jnp.float32)
    sumsq = jnp.sum(x * x, axis=1, keepdims=True)
    xn = x * lax.rsqrt(jnp.maximum(sumsq, jnp.float32(1e-24)))
    xn = xn.astype(keys_dtype).astype(jnp.float32)
    sim = jnp.exp(xn @ xn.T / temperature)
    pos = jnp.sum(sim * pos_mask, axis=1)
    neg = jnp.sum(sim * neg_mask, axis=1)
    half = x.shape[0] // 2
    pos = pos[:half]
    neg = neg[:half]
    return -jnp.mean(jnp.log(pos / (pos + neg)))


if __name__ == "__main__":
    # Module defaults: embedding_dim=128, batch_size=4, world_size=1,
    # gather_distributed=False, temperature=0.1, num_pos=num_neg=2.
    embedding_dim = 128
    temperature = 0.1

    def build_embedding(batch_size, key):
        ks = jax.random.split(key, 4)
        parts = [jax.random.normal(k, (batch_size, embedding_dim), jnp.float32)
                 for k in ks]
        # embedding = cat([pos0, pos1, neg0, neg1], dim=0) -> (4*batch_size, D)
        return jnp.concatenate(parts, axis=0)

    key = jax.random.PRNGKey(0)
    k_small, k_tiled = jax.random.split(key)

    # (batch_size=4) module-default shape: single tile, roll-by-b positive path.
    # (batch_size=64) exercises the multi-tile accumulator + contiguous-partner path.
    for batch_size, k in ((4, k_small), (64, k_tiled)):
        embedding = build_embedding(batch_size, k)
        loss = jax.block_until_ready(
            negative_mining_infonce_loss(embedding, temperature))

        pos_mask_np, neg_mask_np = precompute_pos_neg_mask(
            batch_size=batch_size, world_size=1, num_pos=2, rank=0)
        ref = jax.block_until_ready(
            _reference_loss(embedding, jnp.asarray(pos_mask_np),
                            jnp.asarray(neg_mask_np), temperature))
        np.testing.assert_allclose(np.asarray(loss), np.asarray(ref),
                                   rtol=5e-3, atol=5e-3)

    print("KERNEL_OK")
</pallas_src>

<mosaic_0001>
module attributes {stable_mosaic.version = 11 : i64} {
  func.func @_infonce_kernel(%arg0: i32, %arg1: memref<16x128xf32, #tpu.memory_space<any>>, %arg2: memref<1x1xf32, #tpu.memory_space<vmem>>, %arg3: memref<16x128xbf16, #tpu.memory_space<vmem>>, %arg4: memref<1x1xf32, #tpu.memory_space<vmem>>) attributes {dimension_semantics = [#tpu.dimension_semantics<arbitrary>], iteration_bounds = array<i64: 1>, scalar_prefetch = 0 : i64, scratch_operands = 2 : i64, tpu.core_type = #tpu.core_type<tc>, window_params = [{}, {pipeline_mode = #tpu.pipeline_mode<synchronous>, transform_indices = @transform_1, window_bounds = array<i64: 1, 1>}]} {
    %c0_i32 = arith.constant 0 : i32
    %0 = arith.cmpi eq, %arg0, %c0_i32 : i32
    %1 = arith.extui %0 : i1 to i32
    %c0_i32_0 = arith.constant 0 : i32
    %2 = arith.cmpi ne, %1, %c0_i32_0 : i32
    scf.if %2 {
      %cst_18 = arith.constant 0.000000e+00 : f32
      %63 = vector.broadcast %cst_18 : f32 to vector<1x1xf32>
      %c0_19 = arith.constant 0 : index
      %c0_20 = arith.constant 0 : index
      %64 = vector.load %arg4[%c0_19, %c0_20] : memref<1x1xf32, #tpu.memory_space<vmem>>, vector<1x1xf32>
      tpu.vector_store %arg4[%c0_19, %c0_20], %63 {strides = array<i32>} : memref<1x1xf32, #tpu.memory_space<vmem>>, vector<1x1xf32>,
      "tpu.region"() ({
        %alloca = memref.alloca() : memref<16x128xf32, #tpu.memory_space<vmem>>
        "tpu.region"() ({
          %76 = tpu.sem_alloc : memref<!tpu.dma_semaphore, #tpu.memory_space<semaphore_mem>>
          tpu.enqueue_dma source(%arg1 : memref<16x128xf32, #tpu.memory_space<any>>) target(%alloca : memref<16x128xf32, #tpu.memory_space<vmem>>) target_semaphore(%76 : memref<!tpu.dma_semaphore, #tpu.memory_space<semaphore_mem>>)
          tpu.wait_dma2 semaphore(%76 : memref<!tpu.dma_semaphore, #tpu.memory_space<semaphore_mem>>) src(%arg1 : memref<16x128xf32, #tpu.memory_space<any>>) dst(%alloca : memref<16x128xf32, #tpu.memory_space<vmem>>)
          tpu.yield
        }) : () -> ()
        %c0_21 = arith.constant 0 : index
        %c0_22 = arith.constant 0 : index
        %65 = vector.load %alloca[%c0_21, %c0_22] : memref<16x128xf32, #tpu.memory_space<vmem>>, vector<16x128xf32>
        %66 = arith.mulf %65, %65 : vector<16x128xf32>
        %cst_23 = arith.constant dense<0.000000e+00> : vector<16xf32>
        %67 = vector.multi_reduction <add>, %66, %cst_23 [1] : vector<16x128xf32> to vector<16xf32>
        %68 = vector.shape_cast %67 : vector<16xf32> to vector<16x1xf32>
        %cst_24 = arith.constant 1.000000e-24 : f32
        %69 = vector.broadcast %cst_24 : f32 to vector<16x1xf32>
        %70 = arith.maximumf %68, %69 : vector<16x1xf32>
        %71 = math.rsqrt %70 : vector<16x1xf32>
        %72 = vector.broadcast %71 : vector<16x1xf32> to vector<16x128xf32>
        %73 = arith.mulf %65, %72 : vector<16x128xf32>
        %74 = arith.truncf %73 : vector<16x128xf32> to vector<16x128xbf16>
        %c0_25 = arith.constant 0 : index
        %c0_26 = arith.constant 0 : index
        %75 = vector.load %arg3[%c0_25, %c0_26] : memref<16x128xbf16, #tpu.memory_space<vmem>>, vector<16x128xbf16>
        tpu.vector_store %arg3[%c0_25, %c0_26], %74 {strides = array<i32>} : memref<16x128xbf16, #tpu.memory_space<vmem>>, vector<16x128xbf16>,
        tpu.yield
      }) : () -> ()
    } else {
    }
    %c8_i32 = arith.constant 8 : i32
    %3 = arith.muli %arg0, %c8_i32 : i32
    %4 = tpu.assume_multiple %3, 8 : i32
    %5 = arith.index_cast %4 : i32 to index
    %c0 = arith.constant 0 : index
    %6 = vector.load %arg3[%5, %c0] : memref<16x128xbf16, #tpu.memory_space<vmem>>, vector<8x128xbf16>
    %c8 = arith.constant 8 : index
    %c0_1 = arith.constant 0 : index
    %7 = vector.load %arg3[%c8, %c0_1] : memref<16x128xbf16, #tpu.memory_space<vmem>>, vector<8x128xbf16>
    %cst = arith.constant dense<0.000000e+00> : vector<8x8xf32>
    %8 = tpu.matmul %6, %7, %cst {dimension_numbers = #tpu.dot_dimension_numbers<[1], [1], [0], [0], [0, 0, 1, 0], [], []>} : vector<8x128xbf16>, vector<8x128xbf16>, vector<8x8xf32> -> vector<8x8xf32>
    %cst_2 = arith.constant 1.000000e+01 : f32
    %9 = vector.broadcast %cst_2 : f32 to vector<8x8xf32>
    %10 = arith.mulf %8, %9 : vector<8x8xf32>
    %cst_3 = arith.constant 1.000000e+01 : f32
    %11 = vector.broadcast %cst_3 : f32 to vector<8x8xf32>
    %12 = arith.subf %10, %11 : vector<8x8xf32>
    %13 = math.exp %12 : vector<8x8xf32>
    %14 = arith.extf %6 : vector<8x128xbf16> to vector<8x128xf32>
    %15 = vector.extract_strided_slice %14 {offsets = [4, 0], sizes = [4, 128], strides = [1, 1]} : vector<8x128xf32> to vector<4x128xf32>
    %16 = vector.extract_strided_slice %14 {offsets = [0, 0], sizes = [4, 128], strides = [1, 1]} : vector<8x128xf32> to vector<4x128xf32>
    %17 = tpu.concatenate %15, %16 in 0 : vector<4x128xf32>, vector<4x128xf32> -> vector<8x128xf32>
    %18 = arith.mulf %14, %17 : vector<8x128xf32>
    %cst_4 = arith.constant dense<0.000000e+00> : vector<8xf32>
    %19 = vector.multi_reduction <add>, %18, %cst_4 [1] : vector<8x128xf32> to vector<8xf32>
    %20 = vector.shape_cast %19 : vector<8xf32> to vector<8x1xf32>
    %cst_5 = arith.constant 1.000000e+01 : f32
    %21 = vector.broadcast %cst_5 : f32 to vector<8x1xf32>
    %22 = arith.mulf %20, %21 : vector<8x1xf32>
    %cst_6 = arith.constant 1.000000e+01 : f32
    %23 = vector.broadcast %cst_6 : f32 to vector<8x1xf32>
    %24 = arith.subf %22, %23 : vector<8x1xf32>
    %25 = math.exp %24 : vector<8x1xf32>
    %26 = tpu.iota {dimensions = array<i32: 0>} : vector<8x1xi32>
    %27 = vector.broadcast %4 : i32 to vector<8x1xi32>
    %28 = arith.addi %27, %26 : vector<8x1xi32>
    %c4_i32 = arith.constant 4 : i32
    %29 = vector.broadcast %c4_i32 : i32 to vector<8x1xi32>
    %30 = arith.cmpi sge, %28, %29 : vector<8x1xi32>
    %c4_i32_7 = arith.constant 4 : i32
    %31 = vector.broadcast %c4_i32_7 : i32 to vector<8x1xi32>
    %32 = arith.subi %28, %31 : vector<8x1xi32>
    %33 = arith.select %30, %32, %28 : vector<8x1xi1>, vector<8x1xi32>
    %34 = tpu.iota {dimensions = array<i32: 1>} : vector<1x8xi32>
    %35 = vector.broadcast %34 : vector<1x8xi32> to vector<8x8xi32>
    %36 = vector.broadcast %33 : vector<8x1xi32> to vector<8x8xi32>
    %37 = arith.cmpi ne, %35, %36 : vector<8x8xi32>
    %c4_i32_8 = arith.constant 4 : i32
    %38 = vector.broadcast %c4_i32_8 : i32 to vector<8x1xi32>
    %39 = arith.addi %33, %38 : vector<8x1xi32>
    %40 = vector.broadcast %34 : vector<1x8xi32> to vector<8x8xi32>
    %41 = vector.broadcast %39 : vector<8x1xi32> to vector<8x8xi32>
    %42 = arith.cmpi ne, %40, %41 : vector<8x8xi32>
    %43 = arith.andi %37, %42 : vector<8x8xi1>
    %cst_9 = arith.constant 0.000000e+00 : f32
    %44 = vector.broadcast %cst_9 : f32 to vector<8x8xf32>
    %45 = arith.select %43, %13, %44 : vector<8x8xi1>, vector<8x8xf32>
    %cst_10 = arith.constant dense<0.000000e+00> : vector<8xf32>
    %46 = vector.multi_reduction <add>, %45, %cst_10 [1] : vector<8x8xf32> to vector<8xf32>
    %47 = vector.shape_cast %46 : vector<8xf32> to vector<8x1xf32>
    %48 = math.log %25 : vector<8x1xf32>
    %49 = arith.addf %25, %47 : vector<8x1xf32>
    %50 = math.log %49 : vector<8x1xf32>
    %51 = arith.subf %48, %50 : vector<8x1xf32>
    %c0_11 = arith.constant 0 : index
    %c0_12 = arith.constant 0 : index
    %52 = vector.load %arg4[%c0_11, %c0_12] : memref<1x1xf32, #tpu.memory_space<vmem>>, vector<1x1xf32>
    %53 = vector.shape_cast %51 : vector<8x1xf32> to vector<1x8x1xf32>
    %cst_13 = arith.constant dense<0.000000e+00> : vector<1xf32>
    %54 = vector.multi_reduction <add>, %53, %cst_13 [1, 2] : vector<1x8x1xf32> to vector<1xf32>
    %55 = vector.shape_cast %54 : vector<1xf32> to vector<1x1x1xf32>
    %56 = vector.extract %55[0, 0, 0] : f32 from vector<1x1x1xf32>
    %57 = vector.broadcast %56 : f32 to vector<1x1xf32>
    %58 = arith.addf %52, %57 : vector<1x1xf32>
    %c0_14 = arith.constant 0 : index
    %c0_15 = arith.constant 0 : index
    %59 = vector.load %arg4[%c0_14, %c0_15] : memref<1x1xf32, #tpu.memory_space<vmem>>, vector<1x1xf32>
    tpu.vector_store %arg4[%c0_14, %c0_15], %58 {strides = array<i32>} : memref<1x1xf32, #tpu.memory_space<vmem>>, vector<1x1xf32>,
    %c0_i32_16 = arith.constant 0 : i32
    %60 = arith.cmpi eq, %arg0, %c0_i32_16 : i32
    %61 = arith.extui %60 : i1 to i32
    %c0_i32_17 = arith.constant 0 : i32
    %62 = arith.cmpi ne, %61, %c0_i32_17 : i32
    scf.if %62 {
      %c0_18 = arith.constant 0 : index
      %c0_19 = arith.constant 0 : index
      %63 = vector.load %arg4[%c0_18, %c0_19] : memref<1x1xf32, #tpu.memory_space<vmem>>, vector<1x1xf32>
      %cst_20 = arith.constant 0.000000e+00 : f32
      %64 = vector.broadcast %cst_20 : f32 to vector<1x1xf32>
      %65 = arith.subf %64, %63 : vector<1x1xf32>
      %cst_21 = arith.constant 1.250000e-01 : f32
      %66 = vector.broadcast %cst_21 : f32 to vector<1x1xf32>
      %67 = arith.mulf %65, %66 : vector<1x1xf32>
      %c0_22 = arith.constant 0 : index
      %c0_23 = arith.constant 0 : index
      %68 = vector.load %arg2[%c0_22, %c0_23] : memref<1x1xf32, #tpu.memory_space<vmem>>, vector<1x1xf32>
      tpu.vector_store %arg2[%c0_22, %c0_23], %67 {strides = array<i32>} : memref<1x1xf32, #tpu.memory_space<vmem>>, vector<1x1xf32>,
    } else {
    }
    return
  }
  func.func @transform_1(%arg0: i32) -> (i32, i32) {
    %c0_i32 = arith.constant 0 : i32
    %c0_i32_0 = arith.constant 0 : i32
    %c0_i32_1 = arith.constant 0 : i32
    return %c0_i32, %c0_i32_0 : i32, i32
  }
}

</mosaic_0001>

<llo_original>
// kernel: tpu_custom_call.1
$region0: #{tpu_custom_call.1}
  #allocation0 [shape = 'u32[]', space=smem, size = 0x4, offset = 0x4, fixed_abs, tag = 'smem constant byte address 0x4 - core index']
  #allocation1 [shape = 'u32[144,128]{1,0:T(1,128)}', space=vmem, size = 0x12000, scoped, tag = 'internal scratch']
  #allocation2 [shape = 'bf16[16,128]{1,0:T(8,128)(2,1)}', space=vmem, size = 0x1000, scoped, tag = 'scratch operand']
  #allocation3 [shape = 'f32[1,1]{1,0:T(1,128)}', space=vmem, size = 0x200, scoped, tag = 'scratch operand']
  #allocation8 [shape = 's32[]', space=sflag, size = 0x4, offset = 0, fixed_abs, tag = 'sflag constant byte address 0x0 - dummy sync flag']
  #allocation9 [shape = 's32[]', space=sflag, size = 0x4, offset = 0, fixed_abs, tag = 'sflag constant byte address 0x0 - dummy sync flag']
  #allocation10 [shape = 'u32[]', space=smem, size = 0x4, offset = 0x44, fixed_abs, tag = 'smem constant byte address 0x44 - assertion arg 0']
  #allocation11 [shape = 'u32[]', space=smem, size = 0x4, offset = 0x48, fixed_abs, tag = 'smem constant byte address 0x48 - assertion arg 1']
  %s0 = inlined_call_operand.hbm [shape: f32[16,128], index: 0, kind: input, shape index: {}]
  %s1 = inlined_call_operand.hbm [shape: f32[1,1], index: 1, kind: output, shape index: {}]
  %s2 = sld [smem:[#allocation0]]
  $region24: #{tpu_custom_call.1} parent=0
    _
  %s4 = ssub.s32 1, %s2
  %s5 = scalar_select 0, %s4, %s2
  $region1: #{tpu_custom_call.1} parent=0
    #allocation4 [shape = 'u8[512]{0}', space=vmem, size = 0x400, scoped, tag = 'output window, operand 0, single buffered']
    #allocation5 [shape = 's32[1]{0}', space=sflag, size = 0x4, scoped, tag = 'scoped memory for tpu_custom_call.1']
    %6 = vsyncpa [#allocation5], 0
    %p8 = scmp.eq.s32.totalorder 0, 0
    // Predicated region
    $region2: #{tpu_custom_call.1} parent=1 // pred_check
      %p9 = pneg %p8
    $region3: #{tpu_custom_call.1} parent=1 // pred_check_branch
      %11 = sbr.rel (%p9) target = $region5
    $region4: #{tpu_custom_call.1} parent=1 // pred_region
      %vm12 = vcmask 0
      %13 = vst.msk [vmem:[#allocation3] sm:$0x1] %vm12, 0.0
      $region6: #{tpu_custom_call.1} parent=4
        #allocation6 [shape = 'u8[8192]{0}', space=vmem, size = 0x2000, scoped, tag = 'scoped memory for tpu_custom_call.1']
        $region7: #{tpu_custom_call.1} parent=6
          #allocation7 [shape = 's32[1]{0}', space=sflag, size = 0x4, scoped, tag = 'scoped memory for tpu_custom_call.1']
          // Predicated region
          $region8: #{tpu_custom_call.1} parent=7 // pred_check
            _
          $region9: #{tpu_custom_call.1} parent=7 // pred_check_branch
            %15 = sbr.rel target = $region11
          $region10: #{tpu_custom_call.1} parent=7 // pred_region
            %16 = sst [smem:[#allocation10]] [#allocation9]
            %17 = sst [smem:[#allocation11]] [#allocation8]
          $region11: #{tpu_custom_call.1} parent=7 // pred_fallthru
            _
          %19 = shalt.err (0)
          %s21 = sshll.u32 [#allocation6], 4
          %s22 = int_to_ptr.vmem [resolvable:$true] %s21
          %24 = dma.hbm_to_vmem [thread:$0]  %s0, 256, %s22, [#allocation7]
          %s25 = smul.u32 16, 1
          %s26 = sshll.u32 %s25, 4
          %27 = dma.done [#allocation7], %s26
        %v28 = vld [vmem:[#allocation6] sm:$0xff]
        %v29 = vld [vmem:[#allocation6 + $0x8] sm:$0xff]
        %v30 = vmul.f32 %v28, %v28
        %v31 = vmul.f32 %v29, %v29
        %32 = vadd.xlane.f32.xlu0 %v30
        %v33 = vpop.xlane.xlu0 %32
        %34 = vadd.xlane.f32.xlu0 %v31
        %v35 = vpop.xlane.xlu0 %34
        %v36 = vmax.f32 %v33, 1e-24
        %v37 = vmax.f32 %v35, 1e-24
        %v38 = vrsqrt.pop %v36
        %v39 = vrsqrt.pop %v37
        %v40 = vmul.f32 %v28, %v38
        %v41 = vmul.f32 %v29, %v39
        %v42 = vpack.c.bf16 %v41, %v40
        %v44 = vunpack.c.l.b16 %v42
        %v45 = vunpack.c.h.b16 %v42
        %v46 = vpack.c.b16 %v44, %v44
        %v47 = vpack.c.b16 %v45, %v45
        %50 = vst [vmem:[#allocation2] sm:$0xf] %v46
        %51 = vst [vmem:[#allocation2 + $0x4] sm:$0xf] %v47
    $region5: #{tpu_custom_call.1} parent=1 // pred_fallthru
      _
    %s52 = smul.u32 0, 8
    %s53 = sshra.s32 %s52, 3
    %s54 = sand.u32 %s52, 7
    %s55 = smul.addr %s53, 4
    %s56 = scalar_lea.vmem [#allocation2], %s55
    %v57 = vld [vmem:[%s56] sm:$0xf]
    %v58 = vld [vmem:[#allocation2 + $0x4] sm:$0xf]
    %59 = vmatprep.subr.bf16.mxu0 0
    %60 = vmatpush1.bf16.xpose.msra.mxu0 0
    %61 = vmatprep.subr.bf16.mxu0 0
    %62 = vmatpush1.bf16.xpose.msra.mxu0 0
    %63 = vmatprep.subr.bf16.mxu0 0
    %64 = vmatpush1.bf16.xpose.msra.mxu0 0
    %65 = vmatprep.subr.bf16.mxu0 0
    %66 = vmatpush1.bf16.xpose.msra.mxu0 0
    %67 = vmatprep.subr.bf16.mxu0 0
    %68 = vmatpush1.bf16.xpose.msra.mxu0 0
    %69 = vmatprep.subr.bf16.mxu0 0
    %70 = vmatpush1.bf16.xpose.msra.mxu0 0
    %71 = vmatprep.subr.bf16.mxu0 0
    %72 = vmatpush1.bf16.xpose.msra.mxu0 0
    %73 = vmatprep.subr.bf16.mxu0 0
    %74 = vmatpush1.bf16.xpose.msra.mxu0 %v58
    %75 = vmatprep.subr.bf16.mxu0 0
    %76 = vmatpush2.bf16.xpose.msra.mxu0 0
    %77 = vmatprep.subr.bf16.mxu0 0
    %78 = vmatpush2.bf16.xpose.msra.mxu0 0
    %79 = vmatprep.subr.bf16.mxu0 0
    %80 = vmatpush2.bf16.xpose.msra.mxu0 0
    %81 = vmatprep.subr.bf16.mxu0 0
    %82 = vmatpush2.bf16.xpose.msra.mxu0 0
    %83 = vmatprep.subr.bf16.mxu0 0
    %84 = vmatpush2.bf16.xpose.msra.mxu0 0
    %85 = vmatprep.subr.bf16.mxu0 0
    %86 = vmatpush2.bf16.xpose.msra.mxu0 0
    %87 = vmatprep.subr.bf16.mxu0 0
    %88 = vmatpush2.bf16.xpose.msra.mxu0 0
    %89 = vmatprep.subr.bf16.mxu0 0
    %90 = vmatpush2.bf16.xpose.msra.mxu0 0
    %91 = vmatprep.mubr.bf16.mxu0 0
    %92 = vmatmul.mubr.bf16.gmra.mxu0 %v57
    %v93 = vpop.f32.mrf.mxu0
    %v94 = vadd.f32 0.0, %v93
    %v95 = vpop.f32.mrf.mxu0
    %v96 = vpop.f32.mrf.mxu0
    %v97 = vpop.f32.mrf.mxu0
    %98 = vdwg.mxu0
    %v99 = vmul.f32 %v94, 10.0
    %v100 = vsub.f32 %v99, 10.0
    %v101 = vmul.f32 %v100, 1.442695
    %v102 = vpow.pop %v101
    %v103 = vunpack.c.l.bf16 %v57
    %v105 = vrot.slane %v103, 4
    %vm107 = vcmask 1043456
    %v108 = vsel %vm107, %v105, %v105
    %v109 = vmul.f32 %v103, %v108
    %110 = vadd.xlane.f32.xlu0 %v109
    %v111 = vpop.xlane.xlu0 %110
    %v112 = vmul.f32 %v111, 10.0
    %v113 = vsub.f32 %v112, 10.0
    %v114 = vmul.f32 %v113, 1.442695
    %v115 = vpow.pop %v114
    %v116 = vlaneseq
    %v117 = vshrl.u32 %v116, 7
    %v118 = vstv %s52
    %v119 = vadd.s32 %v118, %v117
    %vm120 = vcmp.ge.s32.totalorder %v119, 4
    %v121 = vsub.s32 %v119, 4
    %v122 = vsel %vm120, %v121, %v119
    %v123 = vlaneseq
    %v124 = vand.u32 %v123, 127
    %vm125 = vcmp.ne.s32.totalorder %v124, %v122
    %v126 = vadd.s32 %v122, 4
    %vm127 = vcmp.ne.s32.totalorder %v124, %v126
    %vm128 = vmand %vm125, %vm127
    %v129 = vsel %vm128, %v102, 0.0
    %vm130 = vcmask 64512
    %v131 = vsel %vm130, %v129, 0.0
    %132 = vadd.xlane.f32.xlu0 %v131
    %v133 = vpop.xlane.xlu0 %132
    %v134 = vlog2.pop %v115
    %v135 = vmul.f32 %v134, 0.6931472
    %v136 = vadd.f32 %v115, %v133
    %v137 = vlog2.pop %v136
    %v138 = vmul.f32 %v137, 0.6931472
    %v139 = vsub.f32 %v135, %v138
    %v140 = vld [vmem:[#allocation3] sm:$0x1]
    %vm141 = vcmask 7168
    %v142 = vsel %vm141, %v139, 0.0
    %143 = vadd.xlane.f32.xlu0 %v142
    %v144 = vpop.xlane.xlu0 %143
    %v145 = vrot.slane %v144, 4
    %v146 = vadd.f32 %v144, %v145
    %v147 = vrot.slane %v146, 2
    %v148 = vadd.f32 %v146, %v147
    %v149 = vrot.slane %v148, 1
    %v150 = vadd.f32 %v148, %v149
    %s151 = vtos %v150
    %v152 = vstv %s151
    %v153 = vadd.f32 %v140, %v152
    %vm154 = vcmask 0
    %155 = vst.msk [vmem:[#allocation3] sm:$0x1] %vm154, %v153
    // Predicated region
    $region12: #{tpu_custom_call.1} parent=1 // pred_check
      %p156 = pneg %p8
    $region13: #{tpu_custom_call.1} parent=1 // pred_check_branch
      %158 = sbr.rel (%p156) target = $region15
    $region14: #{tpu_custom_call.1} parent=1 // pred_region
      %v159 = vld [vmem:[#allocation3] sm:$0x1]
      %v160 = vsub.f32 0.0, %v159
      %v161 = vmul.f32 %v160, 0.125
      %162 = vst.msk [vmem:[#allocation4] sm:$0x1] %vm154, %v161
    $region15: #{tpu_custom_call.1} parent=1 // pred_fallthru
      _
    // Predicated region
    $region16: #{tpu_custom_call.1} parent=1 // pred_check
      _
    $region17: #{tpu_custom_call.1} parent=1 // pred_check_branch
      %164 = sbr.rel (0) target = $region19
    $region18: #{tpu_custom_call.1} parent=1 // pred_region
      %s166 = ssub.s32 16, 16
      %167 = vsyncadd [#allocation5], %s166
      %s169 = sshll.u32 [#allocation4], 4
      %s170 = int_to_ptr.vmem [resolvable:$true] %s169
      %172 = dma.vmem_to_hbm [thread:$0]  %s170, 16, %s1, [#allocation5]
    $region19: #{tpu_custom_call.1} parent=1 // pred_fallthru
      _
    // Predicated region
    $region20: #{tpu_custom_call.1} parent=1 // pred_check
      _
    $region21: #{tpu_custom_call.1} parent=1 // pred_check_branch
      %174 = sbr.rel (0) target = $region23
    $region22: #{tpu_custom_call.1} parent=1 // pred_region
      %175 = dma.done [#allocation5], 16
    $region23: #{tpu_custom_call.1} parent=1 // pred_fallthru
      _
    %176 = vsyncpa [#allocation5], 1

</llo_original>
